<compile_context>
chip_gen: v7x
topology: tpu7x:2x2x1
jax: 0.10.0
libtpu: 0.0.40
codegen_flags: <defaults>
</compile_context>

<pallas_src>
import functools

import jax
import jax.numpy as jnp
from jax.experimental import pallas as pl
from jax.experimental.pallas import tpu as pltpu

MARGIN = 1.0
EPS = 1e-5
BIG = 1e30  # finite stand-in for +inf in masked min reductions (never squared)
_MiB = 1024 * 1024


def _round_up(x, m):
    return ((x + m - 1) // m) * m


def _device_hints():
    """(num_tensorcores, physical_vmem_bytes) with a conservative fallback."""
    num_tc, vmem_phys = 1, 128 * _MiB          # v5e / v6e
    try:
        kind = jax.devices()[0].device_kind.lower()
    except Exception:
        return num_tc, 64 * _MiB               # unknown -> assume worst case
    if "v7" in kind:
        num_tc, vmem_phys = 2, 64 * _MiB       # v7x: 2 TCs, 64 MiB VMEM per TC
    return num_tc, vmem_phys


def _vmem_estimate(tq, tk, dp, op_itemsize):
    """Rough VMEM footprint for one grid step (double-buffered blocks)."""
    mm = 2 * (tq * dp + dp * tk) * op_itemsize        # MXU operand blocks
    small = 2 * (2 * tq * 128 + 2 * 8 * tk) * 4       # sq/label blocks (layout-padded)
    out = 2 * tq * 128 * 4                            # (TQ,1) output block (lane-padded)
    scratch = 2 * tq * 128 * 4                        # lane-wide running-min accumulators
    live = 6 * tq * tk * 4                            # gram/dsq/masks/selected values
    return mm + small + out + scratch + live


def _pick_tiles(n, dp, op_itemsize):
    """Choose (TQ, TK, vmem_limit_bytes): maximize TQ under the VMEM budget."""
    num_tc, vmem_phys = _device_hints()
    budget = (2 * vmem_phys) // 3                              # leave headroom
    vmem_limit = int(min(vmem_phys - 8 * _MiB,
                         max(budget + 8 * _MiB, 32 * _MiB)))

    # Row-block cap: never bigger than the padded batch; on multi-TC chips make
    # sure the "parallel" row axis has >= 2 blocks so both TensorCores get work.
    tq_cap = _round_up(n, 8)
    if num_tc >= 2 and tq_cap > 128:
        tq_cap = min(tq_cap, max(128, _round_up((n + 1) // 2, 8)))

    tk_full = _round_up(n, 128)
    for tq in (1024, 512, 256, 128, 64, 32, 16, 8):
        tq = min(tq, tq_cap)
        for tk in (512, 256, 128):
            tk = min(tk, tk_full)
            if _vmem_estimate(tq, tk, dp, op_itemsize) <= budget:
                return tq, tk, vmem_limit
    return 8, 128, vmem_limit                                  # pathological D fallback


def _accum_lane_min(acc_ref, masked, tk):
    """acc_ref: (TQ,128) running min; masked: (TQ,TK). Elementwise mins only."""
    acc = acc_ref[...]
    for g in range(tk // 128):                    # static lane-group slices
        acc = jnp.minimum(acc, masked[:, g * 128:(g + 1) * 128])
    acc_ref[...] = acc


def _triplet_hard_kernel(n_real, tq, tk,
                         fq_ref, fkt_ref, sqc_ref, sqr_ref,
                         labc_ref, labr_ref, out_ref,
                         minpos_ref, minneg_ref):
    i = pl.program_id(0)          # row-block index   (parallel)
    k = pl.program_id(1)          # column-block index (arbitrary / reduction)

    @pl.when(k == 0)
    def _init():
        minpos_ref[...] = jnp.full_like(minpos_ref, BIG)
        minneg_ref[...] = jnp.full_like(minneg_ref, BIG)

    gram = jnp.dot(fq_ref[...], fkt_ref[...],
                   preferred_element_type=jnp.float32)          # MXU (TQ,TK)

    # Squared pairwise distances. eps is folded into sq_col in the wrapper and
    # padded columns carry sq_row = BIG, so they lose every min automatically.
    dsq = sqc_ref[...] + (sqr_ref[...] - 2.0 * gram)            # (TQ,TK)

    same = labc_ref[...] == labr_ref[...]                       # (TQ,TK)
    big = jnp.float32(BIG)

    # Hardest negative: different label.
    _accum_lane_min(minneg_ref, jnp.where(same, big, dsq), tk)

    # Hardest positive: same label, excluding the diagonal. The iota/compare
    # is only paid on tiles whose row/column ranges can intersect the diagonal.
    overlaps_diag = jnp.logical_and(i * tq < k * tk + tk, k * tk < i * tq + tq)

    @pl.when(overlaps_diag)
    def _pos_with_diag():
        rid = i * tq + jax.lax.broadcasted_iota(jnp.int32, (tq, 1), 0)
        cid = k * tk + jax.lax.broadcasted_iota(jnp.int32, (1, tk), 1)
        keep = jnp.logical_and(same, rid != cid)
        _accum_lane_min(minpos_ref, jnp.where(keep, dsq, big), tk)

    @pl.when(jnp.logical_not(overlaps_diag))
    def _pos_no_diag():
        _accum_lane_min(minpos_ref, jnp.where(same, dsq, big), tk)

    @pl.when(k == pl.num_programs(1) - 1)
    def _finalize():
        # One cross-lane min per row block; sqrt only on the (TQ,1) winners.
        min_pos = jnp.min(minpos_ref[...], axis=1, keepdims=True)
        min_neg = jnp.min(minneg_ref[...], axis=1, keepdims=True)
        d_pos = jnp.sqrt(jnp.maximum(min_pos, 0.0))
        d_neg = jnp.sqrt(jnp.maximum(min_neg, 0.0))
        hinge = jnp.maximum(jnp.float32(MARGIN) + d_pos - d_neg, 0.0)
        rid = i * tq + jax.lax.broadcasted_iota(jnp.int32, (tq, 1), 0)
        out_ref[...] = jnp.where(rid < n_real, hinge, 0.0)      # mask padded rows


def triplet_hard(feature, label, *, mxu_dtype=jnp.float32):
    """feature: (N, D) float, label: (N,) int -> scalar float32 loss.

    mxu_dtype=jnp.bfloat16 halves the dominant HBM stream and uses the bf16 MXU
    rate; squared norms are always computed from the f32 features.
    """
    N, D = feature.shape
    f = feature.astype(jnp.float32)
    lab = label.astype(jnp.int32)

    Dp = _round_up(D, 128)
    op_itemsize = jnp.dtype(mxu_dtype).itemsize
    TQ, TK, vmem_limit = _pick_tiles(N, Dp, op_itemsize)
    Nr = _round_up(N, TQ)     # padded row count
    Nc = _round_up(N, TK)     # padded column count

    feat = jnp.pad(f, ((0, Nr - N), (0, Dp - D))).astype(mxu_dtype)      # (Nr, Dp)
    feat_t = jnp.pad(f.T, ((0, Dp - D), (0, Nc - N))).astype(mxu_dtype)  # (Dp, Nc)

    sq = jnp.sum(f * f, axis=1)                                          # (N,) f32
    # eps folded into the row-resident term; padded COLUMNS get a BIG sentinel
    # so they lose every min without an explicit col-validity mask in-kernel.
    sq_col = jnp.pad(sq + jnp.float32(EPS), (0, Nr - N)).reshape(Nr, 1)
    sq_row = jnp.pad(sq, (0, Nc - N), constant_values=BIG).reshape(1, Nc)

    lab_col = jnp.pad(lab, (0, Nr - N), constant_values=-1).reshape(Nr, 1)
    lab_row = jnp.pad(lab, (0, Nc - N), constant_values=-1).reshape(1, Nc)

    grid = (Nr // TQ, Nc // TK)
    kernel = functools.partial(_triplet_hard_kernel, N, TQ, TK)

    hinge = pl.pallas_call(
        kernel,
        out_shape=jax.ShapeDtypeStruct((Nr, 1), jnp.float32),
        grid_spec=pltpu.PrefetchScalarGridSpec(
            num_scalar_prefetch=0,
            grid=grid,
            in_specs=[
                pl.BlockSpec((TQ, Dp), lambda i, k: (i, 0)),   # feat rows
                pl.BlockSpec((Dp, TK), lambda i, k: (0, k)),   # feat^T cols (MXU rhs)
                pl.BlockSpec((TQ, 1), lambda i, k: (i, 0)),    # ||f||^2 + eps (col form)
                pl.BlockSpec((1, TK), lambda i, k: (0, k)),    # ||f||^2 / BIG (row form)
                pl.BlockSpec((TQ, 1), lambda i, k: (i, 0)),    # labels (col form)
                pl.BlockSpec((1, TK), lambda i, k: (0, k)),    # labels (row form)
            ],
            out_specs=pl.BlockSpec((TQ, 1), lambda i, k: (i, 0)),
            scratch_shapes=[
                pltpu.VMEM((TQ, 128), jnp.float32),   # lane-wide running min, same label
                pltpu.VMEM((TQ, 128), jnp.float32),   # lane-wide running min, diff label
            ],
        ),
        compiler_params=pltpu.CompilerParams(
            dimension_semantics=("parallel", "arbitrary"),
            vmem_limit_bytes=vmem_limit),
        cost_estimate=pl.CostEstimate(
            flops=2 * Nr * Nc * Dp,
            transcendentals=2 * Nr,
            bytes_accessed=op_itemsize * (Nr * Dp + (Nr // TQ) * Dp * Nc)
                           + 4 * (2 * Nr + 2 * Nc) + 4 * Nr),
    )(feat, feat_t, sq_col, sq_row, lab_col, lab_row)

    return jnp.sum(hinge) / jnp.float32(N)


def triplet_hard_ref(feature, label):
    """Pure-JAX reference mirroring the PyTorch forward (f32 matmul)."""
    f = feature.astype(jnp.float32)
    sq = jnp.sum(f ** 2, axis=1, keepdims=True)
    gram = jnp.dot(f, f.T, precision=jax.lax.Precision.HIGHEST)
    dist = jnp.sqrt(sq + sq.T + EPS - 2.0 * gram)
    same = label[:, None] == label[None, :]
    same_d = jnp.where(same, dist, jnp.inf)
    same2 = jnp.sort(same_d, axis=1)[:, 1]
    diff_min = jnp.min(jnp.where(same, jnp.inf, dist), axis=1)
    return jnp.mean(jnp.maximum(MARGIN + same2 - diff_min, 0.0))


if __name__ == "__main__":
    key = jax.random.PRNGKey(0)
    N, D = 8, 32
    feature = jax.random.normal(key, (N, D), dtype=jnp.float32)
    label = jnp.array([0, 0, 1, 1, 2, 2, 3, 3], dtype=jnp.int32)

    ref = triplet_hard_ref(feature, label)

    # f32 MXU-operand path (default).
    loss = triplet_hard(feature, label)
    jax.block_until_ready(loss)
    assert bool(jnp.isfinite(loss)), loss
    assert jnp.allclose(loss, ref, atol=5e-3, rtol=5e-3), (loss, ref)

    # bf16 MXU-operand fast path (halves the dominant HBM stream).
    loss_bf16 = triplet_hard(feature, label, mxu_dtype=jnp.bfloat16)
    jax.block_until_ready(loss_bf16)
    assert jnp.allclose(loss_bf16, ref, atol=3e-2, rtol=3e-2), (loss_bf16, ref)

    print("KERNEL_OK")
</pallas_src>

<mosaic_0001>
module attributes {stable_mosaic.version = 11 : i64} {
  func.func @_triplet_hard_kernel(%arg0: i32, %arg1: i32, %arg2: memref<8x128xf32, #tpu.memory_space<vmem>>, %arg3: memref<128x128xf32, #tpu.memory_space<vmem>>, %arg4: memref<8x1xf32, #tpu.memory_space<vmem>>, %arg5: memref<1x128xf32, #tpu.memory_space<vmem>>, %arg6: memref<8x1xi32, #tpu.memory_space<vmem>>, %arg7: memref<1x128xi32, #tpu.memory_space<vmem>>, %arg8: memref<8x1xf32, #tpu.memory_space<vmem>>, %arg9: memref<8x128xf32, #tpu.memory_space<vmem>>, %arg10: memref<8x128xf32, #tpu.memory_space<vmem>>) attributes {dimension_semantics = [#tpu.dimension_semantics<parallel>, #tpu.dimension_semantics<arbitrary>], iteration_bounds = array<i64: 1, 1>, scalar_prefetch = 0 : i64, scratch_operands = 2 : i64, tpu.core_type = #tpu.core_type<tc>, window_params = [{transform_indices = @transform_0, window_bounds = array<i64: 8, 128>}, {transform_indices = @transform_1, window_bounds = array<i64: 128, 128>}, {transform_indices = @transform_2, window_bounds = array<i64: 8, 1>}, {transform_indices = @transform_3, window_bounds = array<i64: 1, 128>}, {transform_indices = @transform_4, window_bounds = array<i64: 8, 1>}, {transform_indices = @transform_5, window_bounds = array<i64: 1, 128>}, {transform_indices = @transform_6, window_bounds = array<i64: 8, 1>}]} {
    %c0_i32 = arith.constant 0 : i32
    %0 = arith.cmpi eq, %arg1, %c0_i32 : i32
    %1 = arith.extui %0 : i1 to i32
    %c0_i32_0 = arith.constant 0 : i32
    %2 = arith.cmpi ne, %1, %c0_i32_0 : i32
    scf.if %2 {
      %cst_28 = arith.constant 1.000000e+30 : f32
      %41 = vector.broadcast %cst_28 : f32 to vector<8x128xf32>
      %c0_29 = arith.constant 0 : index
      %c0_30 = arith.constant 0 : index
      %42 = vector.load %arg9[%c0_29, %c0_30] : memref<8x128xf32, #tpu.memory_space<vmem>>, vector<8x128xf32>
      tpu.vector_store %arg9[%c0_29, %c0_30], %41 {strides = array<i32>} : memref<8x128xf32, #tpu.memory_space<vmem>>, vector<8x128xf32>,
      %cst_31 = arith.constant 1.000000e+30 : f32
      %43 = vector.broadcast %cst_31 : f32 to vector<8x128xf32>
      %c0_32 = arith.constant 0 : index
      %c0_33 = arith.constant 0 : index
      %44 = vector.load %arg10[%c0_32, %c0_33] : memref<8x128xf32, #tpu.memory_space<vmem>>, vector<8x128xf32>
      tpu.vector_store %arg10[%c0_32, %c0_33], %43 {strides = array<i32>} : memref<8x128xf32, #tpu.memory_space<vmem>>, vector<8x128xf32>,
    } else {
    }
    %c0 = arith.constant 0 : index
    %c0_1 = arith.constant 0 : index
    %3 = vector.load %arg2[%c0, %c0_1] : memref<8x128xf32, #tpu.memory_space<vmem>>, vector<8x128xf32>
    %c0_2 = arith.constant 0 : index
    %c0_3 = arith.constant 0 : index
    %4 = vector.load %arg3[%c0_2, %c0_3] : memref<128x128xf32, #tpu.memory_space<vmem>>, vector<128x128xf32>
    %cst = arith.constant dense<0.000000e+00> : vector<8x128xf32>
    %5 = tpu.matmul %3, %4, %cst {dimension_numbers = #tpu.dot_dimension_numbers<[1], [0], [0], [1], [0, 0, 1, 1], [], []>} : vector<8x128xf32>, vector<128x128xf32>, vector<8x128xf32> -> vector<8x128xf32>
    %c0_4 = arith.constant 0 : index
    %c0_5 = arith.constant 0 : index
    %6 = vector.load %arg4[%c0_4, %c0_5] : memref<8x1xf32, #tpu.memory_space<vmem>>, vector<8x1xf32>
    %c0_6 = arith.constant 0 : index
    %c0_7 = arith.constant 0 : index
    %7 = vector.load %arg5[%c0_6, %c0_7] : memref<1x128xf32, #tpu.memory_space<vmem>>, vector<1x128xf32>
    %cst_8 = arith.constant 2.000000e+00 : f32
    %8 = vector.broadcast %cst_8 : f32 to vector<8x128xf32>
    %9 = arith.mulf %8, %5 : vector<8x128xf32>
    %10 = vector.broadcast %7 : vector<1x128xf32> to vector<8x128xf32>
    %11 = arith.subf %10, %9 : vector<8x128xf32>
    %12 = vector.broadcast %6 : vector<8x1xf32> to vector<8x128xf32>
    %13 = arith.addf %12, %11 : vector<8x128xf32>
    %c0_9 = arith.constant 0 : index
    %c0_10 = arith.constant 0 : index
    %14 = vector.load %arg6[%c0_9, %c0_10] : memref<8x1xi32, #tpu.memory_space<vmem>>, vector<8x1xi32>
    %c0_11 = arith.constant 0 : index
    %c0_12 = arith.constant 0 : index
    %15 = vector.load %arg7[%c0_11, %c0_12] : memref<1x128xi32, #tpu.memory_space<vmem>>, vector<1x128xi32>
    %16 = vector.broadcast %14 : vector<8x1xi32> to vector<8x128xi32>
    %17 = vector.broadcast %15 : vector<1x128xi32> to vector<8x128xi32>
    %18 = arith.cmpi eq, %16, %17 : vector<8x128xi32>
    %cst_13 = arith.constant 1.000000e+30 : f32
    %19 = vector.broadcast %cst_13 : f32 to vector<8x128xf32>
    %20 = arith.select %18, %19, %13 : vector<8x128xi1>, vector<8x128xf32>
    %c0_14 = arith.constant 0 : index
    %c0_15 = arith.constant 0 : index
    %21 = vector.load %arg10[%c0_14, %c0_15] : memref<8x128xf32, #tpu.memory_space<vmem>>, vector<8x128xf32>
    %22 = arith.minimumf %21, %20 : vector<8x128xf32>
    %c0_16 = arith.constant 0 : index
    %c0_17 = arith.constant 0 : index
    %23 = vector.load %arg10[%c0_16, %c0_17] : memref<8x128xf32, #tpu.memory_space<vmem>>, vector<8x128xf32>
    tpu.vector_store %arg10[%c0_16, %c0_17], %22 {strides = array<i32>} : memref<8x128xf32, #tpu.memory_space<vmem>>, vector<8x128xf32>,
    %c8_i32 = arith.constant 8 : i32
    %24 = arith.muli %arg0, %c8_i32 : i32
    %c128_i32 = arith.constant 128 : i32
    %25 = arith.muli %arg1, %c128_i32 : i32
    %c128_i32_18 = arith.constant 128 : i32
    %26 = arith.addi %25, %c128_i32_18 : i32
    %27 = arith.cmpi slt, %24, %26 : i32
    %c128_i32_19 = arith.constant 128 : i32
    %28 = arith.muli %arg1, %c128_i32_19 : i32
    %c8_i32_20 = arith.constant 8 : i32
    %29 = arith.muli %arg0, %c8_i32_20 : i32
    %c8_i32_21 = arith.constant 8 : i32
    %30 = arith.addi %29, %c8_i32_21 : i32
    %31 = arith.cmpi slt, %28, %30 : i32
    %32 = arith.andi %27, %31 : i1
    %33 = arith.extui %32 : i1 to i32
    %cst_22 = arith.constant 1.000000e+30 : f32
    %c0_i32_23 = arith.constant 0 : i32
    %34 = arith.cmpi ne, %33, %c0_i32_23 : i32
    scf.if %34 {
      %c8_i32_28 = arith.constant 8 : i32
      %41 = arith.muli %arg0, %c8_i32_28 : i32
      %42 = tpu.iota {dimensions = array<i32: 0>} : vector<8x1xi32>
      %43 = vector.broadcast %41 : i32 to vector<8x1xi32>
      %44 = arith.addi %43, %42 : vector<8x1xi32>
      %c128_i32_29 = arith.constant 128 : i32
      %45 = arith.muli %arg1, %c128_i32_29 : i32
      %46 = tpu.iota {dimensions = array<i32: 1>} : vector<1x128xi32>
      %47 = vector.broadcast %45 : i32 to vector<1x128xi32>
      %48 = arith.addi %47, %46 : vector<1x128xi32>
      %49 = vector.broadcast %44 : vector<8x1xi32> to vector<8x128xi32>
      %50 = vector.broadcast %48 : vector<1x128xi32> to vector<8x128xi32>
      %51 = arith.cmpi ne, %49, %50 : vector<8x128xi32>
      %52 = arith.andi %18, %51 : vector<8x128xi1>
      %53 = vector.broadcast %cst_22 : f32 to vector<8x128xf32>
      %54 = arith.select %52, %13, %53 : vector<8x128xi1>, vector<8x128xf32>
      %c0_30 = arith.constant 0 : index
      %c0_31 = arith.constant 0 : index
      %55 = vector.load %arg9[%c0_30, %c0_31] : memref<8x128xf32, #tpu.memory_space<vmem>>, vector<8x128xf32>
      %56 = arith.minimumf %55, %54 : vector<8x128xf32>
      %c0_32 = arith.constant 0 : index
      %c0_33 = arith.constant 0 : index
      %57 = vector.load %arg9[%c0_32, %c0_33] : memref<8x128xf32, #tpu.memory_space<vmem>>, vector<8x128xf32>
      tpu.vector_store %arg9[%c0_32, %c0_33], %56 {strides = array<i32>} : memref<8x128xf32, #tpu.memory_space<vmem>>, vector<8x128xf32>,
    } else {
    }
    %true = arith.constant true
    %35 = arith.xori %32, %true : i1
    %36 = arith.extui %35 : i1 to i32
    %cst_24 = arith.constant 1.000000e+30 : f32
    %c0_i32_25 = arith.constant 0 : i32
    %37 = arith.cmpi ne, %36, %c0_i32_25 : i32
    scf.if %37 {
      %41 = vector.broadcast %cst_24 : f32 to vector<8x128xf32>
      %42 = arith.select %18, %13, %41 : vector<8x128xi1>, vector<8x128xf32>
      %c0_28 = arith.constant 0 : index
      %c0_29 = arith.constant 0 : index
      %43 = vector.load %arg9[%c0_28, %c0_29] : memref<8x128xf32, #tpu.memory_space<vmem>>, vector<8x128xf32>
      %44 = arith.minimumf %43, %42 : vector<8x128xf32>
      %c0_30 = arith.constant 0 : index
      %c0_31 = arith.constant 0 : index
      %45 = vector.load %arg9[%c0_30, %c0_31] : memref<8x128xf32, #tpu.memory_space<vmem>>, vector<8x128xf32>
      tpu.vector_store %arg9[%c0_30, %c0_31], %44 {strides = array<i32>} : memref<8x128xf32, #tpu.memory_space<vmem>>, vector<8x128xf32>,
    } else {
    }
    %c0_i32_26 = arith.constant 0 : i32
    %38 = arith.cmpi eq, %arg1, %c0_i32_26 : i32
    %39 = arith.extui %38 : i1 to i32
    %c0_i32_27 = arith.constant 0 : i32
    %40 = arith.cmpi ne, %39, %c0_i32_27 : i32
    scf.if %40 {
      %c0_28 = arith.constant 0 : index
      %c0_29 = arith.constant 0 : index
      %41 = vector.load %arg9[%c0_28, %c0_29] : memref<8x128xf32, #tpu.memory_space<vmem>>, vector<8x128xf32>
      %cst_30 = arith.constant dense<0x7F800000> : vector<8xf32>
      %42 = vector.multi_reduction <minimumf>, %41, %cst_30 [1] : vector<8x128xf32> to vector<8xf32>
      %43 = vector.shape_cast %42 : vector<8xf32> to vector<8x1xf32>
      %c0_31 = arith.constant 0 : index
      %c0_32 = arith.constant 0 : index
      %44 = vector.load %arg10[%c0_31, %c0_32] : memref<8x128xf32, #tpu.memory_space<vmem>>, vector<8x128xf32>
      %cst_33 = arith.constant dense<0x7F800000> : vector<8xf32>
      %45 = vector.multi_reduction <minimumf>, %44, %cst_33 [1] : vector<8x128xf32> to vector<8xf32>
      %46 = vector.shape_cast %45 : vector<8xf32> to vector<8x1xf32>
      %cst_34 = arith.constant 0.000000e+00 : f32
      %47 = vector.broadcast %cst_34 : f32 to vector<8x1xf32>
      %48 = arith.maximumf %43, %47 : vector<8x1xf32>
      %49 = math.sqrt %48 : vector<8x1xf32>
      %cst_35 = arith.constant 0.000000e+00 : f32
      %50 = vector.broadcast %cst_35 : f32 to vector<8x1xf32>
      %51 = arith.maximumf %46, %50 : vector<8x1xf32>
      %52 = math.sqrt %51 : vector<8x1xf32>
      %cst_36 = arith.constant 1.000000e+00 : f32
      %53 = vector.broadcast %cst_36 : f32 to vector<8x1xf32>
      %54 = arith.addf %53, %49 : vector<8x1xf32>
      %55 = arith.subf %54, %52 : vector<8x1xf32>
      %cst_37 = arith.constant 0.000000e+00 : f32
      %56 = vector.broadcast %cst_37 : f32 to vector<8x1xf32>
      %57 = arith.maximumf %55, %56 : vector<8x1xf32>
      %c8_i32_38 = arith.constant 8 : i32
      %58 = arith.muli %arg0, %c8_i32_38 : i32
      %59 = tpu.iota {dimensions = array<i32: 0>} : vector<8x1xi32>
      %60 = vector.broadcast %58 : i32 to vector<8x1xi32>
      %61 = arith.addi %60, %59 : vector<8x1xi32>
      %c8_i32_39 = arith.constant 8 : i32
      %62 = vector.broadcast %c8_i32_39 : i32 to vector<8x1xi32>
      %63 = arith.cmpi slt, %61, %62 : vector<8x1xi32>
      %cst_40 = arith.constant 0.000000e+00 : f32
      %64 = vector.broadcast %cst_40 : f32 to vector<8x1xf32>
      %65 = arith.select %63, %57, %64 : vector<8x1xi1>, vector<8x1xf32>
      %c0_41 = arith.constant 0 : index
      %c0_42 = arith.constant 0 : index
      %66 = vector.load %arg8[%c0_41, %c0_42] : memref<8x1xf32, #tpu.memory_space<vmem>>, vector<8x1xf32>
      tpu.vector_store %arg8[%c0_41, %c0_42], %65 {strides = array<i32>} : memref<8x1xf32, #tpu.memory_space<vmem>>, vector<8x1xf32>,
    } else {
    }
    return
  }
  func.func @transform_0(%arg0: i32, %arg1: i32) -> (i32, i32) {
    %c0_i32 = arith.constant 0 : i32
    %c0_i32_0 = arith.constant 0 : i32
    return %arg0, %c0_i32 : i32, i32
  }
  func.func @transform_1(%arg0: i32, %arg1: i32) -> (i32, i32) {
    %c0_i32 = arith.constant 0 : i32
    %c0_i32_0 = arith.constant 0 : i32
    return %c0_i32, %arg1 : i32, i32
  }
  func.func @transform_2(%arg0: i32, %arg1: i32) -> (i32, i32) {
    %c0_i32 = arith.constant 0 : i32
    %c0_i32_0 = arith.constant 0 : i32
    return %arg0, %c0_i32 : i32, i32
  }
  func.func @transform_3(%arg0: i32, %arg1: i32) -> (i32, i32) {
    %c0_i32 = arith.constant 0 : i32
    %c0_i32_0 = arith.constant 0 : i32
    return %c0_i32, %arg1 : i32, i32
  }
  func.func @transform_4(%arg0: i32, %arg1: i32) -> (i32, i32) {
    %c0_i32 = arith.constant 0 : i32
    %c0_i32_0 = arith.constant 0 : i32
    return %arg0, %c0_i32 : i32, i32
  }
  func.func @transform_5(%arg0: i32, %arg1: i32) -> (i32, i32) {
    %c0_i32 = arith.constant 0 : i32
    %c0_i32_0 = arith.constant 0 : i32
    return %c0_i32, %arg1 : i32, i32
  }
  func.func @transform_6(%arg0: i32, %arg1: i32) -> (i32, i32) {
    %c0_i32 = arith.constant 0 : i32
    %c0_i32_0 = arith.constant 0 : i32
    return %arg0, %c0_i32 : i32, i32
  }
}

</mosaic_0001>

<llo_original>
// kernel: tpu_custom_call.1
$region0: #{tpu_custom_call.1}
  #allocation0 [shape = 'u32[]', space=smem, size = 0x4, offset = 0x4, fixed_abs, tag = 'smem constant byte address 0x4 - core index']
  #allocation1 [shape = 'u32[144,128]{1,0:T(1,128)}', space=vmem, size = 0x12000, scoped, tag = 'internal scratch']
  #allocation2 [shape = 'f32[8,128]{1,0:T(8,128)}', space=vmem, size = 0x1000, scoped, tag = 'scratch operand']
  #allocation3 [shape = 'f32[8,128]{1,0:T(8,128)}', space=vmem, size = 0x1000, scoped, tag = 'scratch operand']
  %s0 = inlined_call_operand.hbm [shape: f32[8,128], index: 0, kind: input, shape index: {}]
  %s1 = inlined_call_operand.hbm [shape: f32[128,128], index: 1, kind: input, shape index: {}]
  %s2 = inlined_call_operand.hbm [shape: f32[8,1], index: 2, kind: input, shape index: {}]
  %s3 = inlined_call_operand.hbm [shape: f32[1,128], index: 3, kind: input, shape index: {}]
  %s4 = inlined_call_operand.hbm [shape: s32[8,1], index: 4, kind: input, shape index: {}]
  %s5 = inlined_call_operand.hbm [shape: s32[1,128], index: 5, kind: input, shape index: {}]
  %s6 = inlined_call_operand.hbm [shape: f32[8,1], index: 6, kind: output, shape index: {}]
  %s7 = sld [smem:[#allocation0]]
  $region74: #{tpu_custom_call.1} parent=0
    _
  %s9 = ssub.s32 1, %s7
  %s10 = scalar_select 0, %s9, %s7
  $region1: #{tpu_custom_call.1} parent=0
    #allocation4 [shape = 'u8[4096]{0}', space=vmem, size = 0x1000, scoped, tag = 'input window, operand 0, single buffered']
    #allocation5 [shape = 's32[1]{0}', space=sflag, size = 0x4, scoped, tag = 'scoped memory for tpu_custom_call.1']
    #allocation6 [shape = 's32[1]{0}', space=sflag, size = 0x4, scoped, tag = 'scoped memory for tpu_custom_call.1']
    #allocation7 [shape = 'u8[65536]{0}', space=vmem, size = 0x10000, scoped, tag = 'input window, operand 1, single buffered']
    #allocation8 [shape = 's32[1]{0}', space=sflag, size = 0x4, scoped, tag = 'scoped memory for tpu_custom_call.1']
    #allocation9 [shape = 'u8[4096]{0}', space=vmem, size = 0x1000, scoped, tag = 'input window, operand 2, single buffered']
    #allocation10 [shape = 'u8[512]{0}', space=vmem, size = 0x400, scoped, tag = 'input window, operand 3, single buffered']
    #allocation11 [shape = 's32[1]{0}', space=sflag, size = 0x4, scoped, tag = 'scoped memory for tpu_custom_call.1']
    #allocation12 [shape = 'u8[4096]{0}', space=vmem, size = 0x1000, scoped, tag = 'input window, operand 4, single buffered']
    #allocation13 [shape = 'u8[512]{0}', space=vmem, size = 0x400, scoped, tag = 'input window, operand 5, single buffered']
    #allocation14 [shape = 's32[1]{0}', space=sflag, size = 0x4, scoped, tag = 'scoped memory for tpu_custom_call.1']
    #allocation15 [shape = 'u8[4096]{0}', space=vmem, size = 0x1000, scoped, tag = 'output window, operand 0, single buffered']
    %11 = vsyncpa [#allocation5], 0
    %12 = vsyncpa [#allocation8], 0
    %13 = vsyncpa [#allocation11], 0
    %14 = vsyncpa [#allocation14], 0
    %15 = vsyncpa [#allocation6], 0
    // Predicated region
    $region2: #{tpu_custom_call.1} parent=1 // pred_check
      _
    $region3: #{tpu_custom_call.1} parent=1 // pred_check_branch
      %17 = sbr.rel (0) target = $region5
    $region4: #{tpu_custom_call.1} parent=1 // pred_region
      %s19 = ssub.s32 128, 128
      %20 = vsyncadd [#allocation5], %s19
      %s22 = sshll.u32 [#allocation4], 4
      %s23 = int_to_ptr.vmem [resolvable:$true] %s22
      %25 = dma.hbm_to_vmem [thread:$0]  %s0, 128, %s23, [#allocation5]
    $region5: #{tpu_custom_call.1} parent=1 // pred_fallthru
      _
    // Predicated region
    $region6: #{tpu_custom_call.1} parent=1 // pred_check
      _
    $region7: #{tpu_custom_call.1} parent=1 // pred_check_branch
      %27 = sbr.rel (0) target = $region9
    $region8: #{tpu_custom_call.1} parent=1 // pred_region
      %s29 = ssub.s32 2048, 2048
      %30 = vsyncadd [#allocation8], %s29
      %s31 = sshll.u32 [#allocation7], 4
      %s32 = int_to_ptr.vmem [resolvable:$true] %s31
      %37 = dma.hbm_to_vmem [thread:$0]  %s1, 2048, %s32, [#allocation8], 128, 128, 8
    $region9: #{tpu_custom_call.1} parent=1 // pred_fallthru
      _
    // Predicated region
    $region10: #{tpu_custom_call.1} parent=1 // pred_check
      _
    $region11: #{tpu_custom_call.1} parent=1 // pred_check_branch
      %39 = sbr.rel (0) target = $region13
    $region12: #{tpu_custom_call.1} parent=1 // pred_region
      %s41 = ssub.s32 128, 128
      %42 = vsyncadd [#allocation8], %s41
      %s44 = sshll.u32 [#allocation9], 4
      %s45 = int_to_ptr.vmem [resolvable:$true] %s44
      %47 = dma.hbm_to_vmem [thread:$0]  %s2, 128, %s45, [#allocation8]
    $region13: #{tpu_custom_call.1} parent=1 // pred_fallthru
      _
    // Predicated region
    $region14: #{tpu_custom_call.1} parent=1 // pred_check
      _
    $region15: #{tpu_custom_call.1} parent=1 // pred_check_branch
      %49 = sbr.rel (0) target = $region17
    $region16: #{tpu_custom_call.1} parent=1 // pred_region
      %s51 = ssub.s32 16, 16
      %52 = vsyncadd [#allocation11], %s51
      %s54 = sshll.u32 [#allocation10], 4
      %s55 = int_to_ptr.vmem [resolvable:$true] %s54
      %57 = dma.hbm_to_vmem [thread:$0]  %s3, 16, %s55, [#allocation11]
    $region17: #{tpu_custom_call.1} parent=1 // pred_fallthru
      _
    // Predicated region
    $region18: #{tpu_custom_call.1} parent=1 // pred_check
      _
    $region19: #{tpu_custom_call.1} parent=1 // pred_check_branch
      %59 = sbr.rel (0) target = $region21
    $region20: #{tpu_custom_call.1} parent=1 // pred_region
      %s61 = ssub.s32 128, 128
      %62 = vsyncadd [#allocation11], %s61
      %s64 = sshll.u32 [#allocation12], 4
      %s65 = int_to_ptr.vmem [resolvable:$true] %s64
      %67 = dma.hbm_to_vmem [thread:$0]  %s4, 128, %s65, [#allocation11]
    $region21: #{tpu_custom_call.1} parent=1 // pred_fallthru
      _
    // Predicated region
    $region22: #{tpu_custom_call.1} parent=1 // pred_check
      _
    $region23: #{tpu_custom_call.1} parent=1 // pred_check_branch
      %69 = sbr.rel (0) target = $region25
    $region24: #{tpu_custom_call.1} parent=1 // pred_region
      %s71 = ssub.s32 16, 16
      %72 = vsyncadd [#allocation14], %s71
      %s74 = sshll.u32 [#allocation13], 4
      %s75 = int_to_ptr.vmem [resolvable:$true] %s74
      %77 = dma.hbm_to_vmem [thread:$0]  %s5, 16, %s75, [#allocation14]
    $region25: #{tpu_custom_call.1} parent=1 // pred_fallthru
      _
    // Predicated region
    $region26: #{tpu_custom_call.1} parent=1 // pred_check
      _
    $region27: #{tpu_custom_call.1} parent=1 // pred_check_branch
      %79 = sbr.rel (0) target = $region29
    $region28: #{tpu_custom_call.1} parent=1 // pred_region
      %80 = dma.done [#allocation5], 128
    $region29: #{tpu_custom_call.1} parent=1 // pred_fallthru
      _
    // Predicated region
    $region30: #{tpu_custom_call.1} parent=1 // pred_check
      _
    $region31: #{tpu_custom_call.1} parent=1 // pred_check_branch
      %82 = sbr.rel (0) target = $region33
    $region32: #{tpu_custom_call.1} parent=1 // pred_region
      %83 = dma.done [#allocation8], 2048
    $region33: #{tpu_custom_call.1} parent=1 // pred_fallthru
      _
    // Predicated region
    $region34: #{tpu_custom_call.1} parent=1 // pred_check
      _
    $region35: #{tpu_custom_call.1} parent=1 // pred_check_branch
      %85 = sbr.rel (0) target = $region37
    $region36: #{tpu_custom_call.1} parent=1 // pred_region
      %86 = dma.done [#allocation8], 128
    $region37: #{tpu_custom_call.1} parent=1 // pred_fallthru
      _
    // Predicated region
    $region38: #{tpu_custom_call.1} parent=1 // pred_check
      _
    $region39: #{tpu_custom_call.1} parent=1 // pred_check_branch
      %88 = sbr.rel (0) target = $region41
    $region40: #{tpu_custom_call.1} parent=1 // pred_region
      %89 = dma.done [#allocation11], 16
    $region41: #{tpu_custom_call.1} parent=1 // pred_fallthru
      _
    // Predicated region
    $region42: #{tpu_custom_call.1} parent=1 // pred_check
      _
    $region43: #{tpu_custom_call.1} parent=1 // pred_check_branch
      %91 = sbr.rel (0) target = $region45
    $region44: #{tpu_custom_call.1} parent=1 // pred_region
      %92 = dma.done [#allocation11], 128
    $region45: #{tpu_custom_call.1} parent=1 // pred_fallthru
      _
    // Predicated region
    $region46: #{tpu_custom_call.1} parent=1 // pred_check
      _
    $region47: #{tpu_custom_call.1} parent=1 // pred_check_branch
      %94 = sbr.rel (0) target = $region49
    $region48: #{tpu_custom_call.1} parent=1 // pred_region
      %95 = dma.done [#allocation14], 16
    $region49: #{tpu_custom_call.1} parent=1 // pred_fallthru
      _
    %p96 = scmp.eq.s32.totalorder 0, 0
    // Predicated region
    $region50: #{tpu_custom_call.1} parent=1 // pred_check
      %p97 = pneg %p96
    $region51: #{tpu_custom_call.1} parent=1 // pred_check_branch
      %99 = sbr.rel (%p97) target = $region53
    $region52: #{tpu_custom_call.1} parent=1 // pred_region
      %100 = vst [vmem:[#allocation2] sm:$0xff] 1e+30
      %101 = vst [vmem:[#allocation3] sm:$0xff] 1e+30
    $region53: #{tpu_custom_call.1} parent=1 // pred_fallthru
      _
    %v102 = vld [vmem:[#allocation4] sm:$0xff]
    %v103 = vld [vmem:[#allocation7] sm:$0xff]
    %v104 = vld [vmem:[#allocation7 + $0x8] sm:$0xff]
    %v105 = vld [vmem:[#allocation7 + $0x10] sm:$0xff]
    %v106 = vld [vmem:[#allocation7 + $0x18] sm:$0xff]
    %v107 = vld [vmem:[#allocation7 + $0x20] sm:$0xff]
    %v108 = vld [vmem:[#allocation7 + $0x28] sm:$0xff]
    %v109 = vld [vmem:[#allocation7 + $0x30] sm:$0xff]
    %v110 = vld [vmem:[#allocation7 + $0x38] sm:$0xff]
    %v111 = vld [vmem:[#allocation7 + $0x40] sm:$0xff]
    %v112 = vld [vmem:[#allocation7 + $0x48] sm:$0xff]
    %v113 = vld [vmem:[#allocation7 + $0x50] sm:$0xff]
    %v114 = vld [vmem:[#allocation7 + $0x58] sm:$0xff]
    %v115 = vld [vmem:[#allocation7 + $0x60] sm:$0xff]
    %v116 = vld [vmem:[#allocation7 + $0x68] sm:$0xff]
    %v117 = vld [vmem:[#allocation7 + $0x70] sm:$0xff]
    %v118 = vld [vmem:[#allocation7 + $0x78] sm:$0xff]
    %119 = vmatprep.subr.mxu0 0.0
    %120 = vmatpush1.msra.mxu0 %v103
    %121 = vmatprep.subr.mxu0 0.0
    %122 = vmatpush1.msra.mxu0 %v104
    %123 = vmatprep.subr.mxu0 0.0
    %124 = vmatpush1.msra.mxu0 %v105
    %125 = vmatprep.subr.mxu0 0.0
    %126 = vmatpush1.msra.mxu0 %v106
    %127 = vmatprep.subr.mxu0 0.0
    %128 = vmatpush1.msra.mxu0 %v107
    %129 = vmatprep.subr.mxu0 0.0
    %130 = vmatpush1.msra.mxu0 %v108
    %131 = vmatprep.subr.mxu0 0.0
    %132 = vmatpush1.msra.mxu0 %v109
    %133 = vmatprep.subr.mxu0 0.0
    %134 = vmatpush1.msra.mxu0 %v110
    %135 = vmatprep.subr.mxu0 0.0
    %136 = vmatpush1.msra.mxu0 %v111
    %137 = vmatprep.subr.mxu0 0.0
    %138 = vmatpush1.msra.mxu0 %v112
    %139 = vmatprep.subr.mxu0 0.0
    %140 = vmatpush1.msra.mxu0 %v113
    %141 = vmatprep.subr.mxu0 0.0
    %142 = vmatpush1.msra.mxu0 %v114
    %143 = vmatprep.subr.mxu0 0.0
    %144 = vmatpush1.msra.mxu0 %v115
    %145 = vmatprep.subr.mxu0 0.0
    %146 = vmatpush1.msra.mxu0 %v116
    %147 = vmatprep.subr.mxu0 0.0
    %148 = vmatpush1.msra.mxu0 %v117
    %149 = vmatprep.subr.mxu0 0.0
    %150 = vmatpush1.msra.mxu0 %v118
    %151 = vmatprep.subr.mxu0 0.0
    %152 = vmatpush1.msra.mxu0 0.0
    %153 = vmatprep.subr.mxu0 0.0
    %154 = vmatpush1.msra.mxu0 0.0
    %155 = vmatprep.subr.mxu0 0.0
    %156 = vmatpush1.msra.mxu0 0.0
    %157 = vmatprep.subr.mxu0 0.0
    %158 = vmatpush1.msra.mxu0 0.0
    %159 = vmatprep.subr.mxu0 0.0
    %160 = vmatpush1.msra.mxu0 0.0
    %161 = vmatprep.subr.mxu0 0.0
    %162 = vmatpush1.msra.mxu0 0.0
    %163 = vmatprep.subr.mxu0 0.0
    %164 = vmatpush1.msra.mxu0 0.0
    %165 = vmatprep.subr.mxu0 0.0
    %166 = vmatpush1.msra.mxu0 0.0
    %167 = vmatprep.subr.mxu0 0.0
    %168 = vmatpush1.msra.mxu0 0.0
    %169 = vmatprep.subr.mxu0 0.0
    %170 = vmatpush1.msra.mxu0 0.0
    %171 = vmatprep.subr.mxu0 0.0
    %172 = vmatpush1.msra.mxu0 0.0
    %173 = vmatprep.subr.mxu0 0.0
    %174 = vmatpush1.msra.mxu0 0.0
    %175 = vmatprep.subr.mxu0 0.0
    %176 = vmatpush1.msra.mxu0 0.0
    %177 = vmatprep.subr.mxu0 0.0
    %178 = vmatpush1.msra.mxu0 0.0
    %179 = vmatprep.subr.mxu0 0.0
    %180 = vmatpush1.msra.mxu0 0.0
    %181 = vmatprep.subr.mxu0 0.0
    %182 = vmatpush1.msra.mxu0 0.0
    %183 = vmatprep.mubr.f32.mxu0 0.0
    %184 = vmatmul.mubr.f32.gmra.mrb[0].mxu0 %v102
    %v185 = vpop.f32.mrb[0].mxu0
    %v186 = vadd.f32 0.0, %v185
    %v187 = vpop.f32.mrb[0].mxu0
    %188 = vdwg.mxu0
    %v189 = vld [vmem:[#allocation9] sm:$0xff]
    %v190 = vld [vmem:[#allocation10] sm:$0x1]
    %v191 = vmul.f32 %v186, 2.0
    %v193 = vlaneseq
    %v194 = vshrl.u32 %v193, 7
    %v195 = vsub.s32 0, %v194
    %v196 = vrot.slane %v190, %v195
    %v198 = vsub.f32 %v196, %v191
    %200 = vset.pattern.permute.xlu0 0
    %201 = vperm.xlu0 %200, %v189
    %v202 = vpop.permute.xlu0 %201
    %v204 = vadd.f32 %v202, %v198
    %v205 = vld [vmem:[#allocation12] sm:$0xff]
    %v206 = vld [vmem:[#allocation13] sm:$0x1]
    %207 = vset.pattern.permute.xlu0 0
    %208 = vperm.xlu0 %207, %v205
    %v209 = vpop.permute.xlu0 %208
    %v210 = vlaneseq
    %v211 = vshrl.u32 %v210, 7
    %v212 = vsub.s32 0, %v211
    %v213 = vrot.slane %v206, %v212
    %vm214 = vcmp.eq.s32.totalorder %v209, %v213
    %v215 = vsel %vm214, 1e+30, %v204
    %v216 = vld [vmem:[#allocation3] sm:$0xff]
    %v217 = vmin.f32 %v216, %v215
    %218 = vst [vmem:[#allocation3] sm:$0xff] %v217
    %s219 = smul.u32 0, 8
    %s220 = smul.u32 0, 128
    %s221 = sadd.s32 %s220, 128
    %p222 = scmp.lt.s32.totalorder %s219, %s221
    %s223 = sadd.s32 %s219, 8
    %p224 = scmp.lt.s32.totalorder %s220, %s223
    %p225 = pnand %p222, %p224
    %p226 = pneg %p225
    // Predicated region
    $region54: #{tpu_custom_call.1} parent=1 // pred_check
      _
    $region55: #{tpu_custom_call.1} parent=1 // pred_check_branch
      %228 = sbr.rel (%p225) target = $region57
    $region56: #{tpu_custom_call.1} parent=1 // pred_region
      %v229 = vlaneseq
      %v230 = vshrl.u32 %v229, 7
      %v231 = vstv %s219
      %v232 = vadd.s32 %v231, %v230
      %v233 = vlaneseq
      %v234 = vand.u32 %v233, 127
      %v235 = vstv %s220
      %v236 = vadd.s32 %v235, %v234
      %vm237 = vcmp.ne.s32.totalorder %v232, %v236
      %vm238 = vmand %vm214, %vm237
      %v239 = vsel %vm238, %v204, 1e+30
      %v240 = vld [vmem:[#allocation2] sm:$0xff]
      %v241 = vmin.f32 %v240, %v239
      %242 = vst [vmem:[#allocation2] sm:$0xff] %v241
    $region57: #{tpu_custom_call.1} parent=1 // pred_fallthru
      _
    // Predicated region
    $region58: #{tpu_custom_call.1} parent=1 // pred_check
      %p243 = pneg %p225
    $region59: #{tpu_custom_call.1} parent=1 // pred_check_branch
      %245 = sbr.rel (%p243) target = $region61
    $region60: #{tpu_custom_call.1} parent=1 // pred_region
      %v246 = vsel %vm214, %v204, 1e+30
      %v247 = vld [vmem:[#allocation2] sm:$0xff]
      %v248 = vmin.f32 %v247, %v246
      %249 = vst [vmem:[#allocation2] sm:$0xff] %v248
    $region61: #{tpu_custom_call.1} parent=1 // pred_fallthru
      _
    // Predicated region
    $region62: #{tpu_custom_call.1} parent=1 // pred_check
      %p250 = pneg %p96
    $region63: #{tpu_custom_call.1} parent=1 // pred_check_branch
      %252 = sbr.rel (%p250) target = $region65
    $region64: #{tpu_custom_call.1} parent=1 // pred_region
      %v253 = vld [vmem:[#allocation2] sm:$0xff]
      %254 = vmin.xlane.f32.xlu0 %v253
      %v255 = vpop.xlane.xlu0 %254
      %v256 = vld [vmem:[#allocation3] sm:$0xff]
      %257 = vmin.xlane.f32.xlu0 %v256
      %v258 = vpop.xlane.xlu0 %257
      %v259 = vmax.f32 %v255, 0.0
      %v260 = vrsqrt.pop %v259
      %v261 = vmul.f32 %v259, %v260
      %vm262 = vcmp.eq.f32.partialorder %v259, inf
      %v263 = vsel %vm262, %v259, %v261
      %vm264 = vcmp.eq.f32.partialorder %v259, 0.0
      %v265 = vand.u32 %v259, 2147483648
      %v266 = vsel %vm264, %v265, %v263
      %v267 = vmax.f32 %v258, 0.0
      %v268 = vrsqrt.pop %v267
      %v269 = vmul.f32 %v267, %v268
      %vm270 = vcmp.eq.f32.partialorder %v267, inf
      %v271 = vsel %vm270, %v267, %v269
      %vm272 = vcmp.eq.f32.partialorder %v267, 0.0
      %v273 = vand.u32 %v267, 2147483648
      %v274 = vsel %vm272, %v273, %v271
      %v275 = vadd.f32 %v266, 1.0
      %v276 = vsub.f32 %v275, %v274
      %v277 = vmax.f32 %v276, 0.0
      %v278 = vlaneseq
      %v279 = vshrl.u32 %v278, 7
      %v280 = vstv %s219
      %v281 = vadd.s32 %v280, %v279
      %vm282 = vcmp.lt.s32.totalorder %v281, 8
      %v283 = vsel %vm282, %v277, 0.0
      %vm284 = vcmask 7168
      %285 = vst.msk [vmem:[#allocation15] sm:$0xff] %vm284, %v283
    $region65: #{tpu_custom_call.1} parent=1 // pred_fallthru
      _
    // Predicated region
    $region66: #{tpu_custom_call.1} parent=1 // pred_check
      _
    $region67: #{tpu_custom_call.1} parent=1 // pred_check_branch
      %287 = sbr.rel (0) target = $region69
    $region68: #{tpu_custom_call.1} parent=1 // pred_region
      %s289 = ssub.s32 128, 128
      %290 = vsyncadd [#allocation6], %s289
      %s292 = sshll.u32 [#allocation15], 4
      %s293 = int_to_ptr.vmem [resolvable:$true] %s292
      %295 = dma.vmem_to_hbm [thread:$0]  %s293, 128, %s6, [#allocation6]
    $region69: #{tpu_custom_call.1} parent=1 // pred_fallthru
      _
    // Predicated region
    $region70: #{tpu_custom_call.1} parent=1 // pred_check
      _
    $region71: #{tpu_custom_call.1} parent=1 // pred_check_branch
      %297 = sbr.rel (0) target = $region73
    $region72: #{tpu_custom_call.1} parent=1 // pred_region
      %298 = dma.done [#allocation6], 128
    $region73: #{tpu_custom_call.1} parent=1 // pred_fallthru
      _
    %299 = vsyncpa [#allocation5], 1
    %300 = vsyncpa [#allocation8], 1
    %301 = vsyncpa [#allocation11], 1
    %302 = vsyncpa [#allocation14], 1
    %303 = vsyncpa [#allocation6], 1

</llo_original>
